<compile_context>
chip_gen: v7x
topology: tpu7x:2x2x1
jax: 0.10.0
libtpu: 0.0.40
codegen_flags: <defaults>
</compile_context>

<pallas_src>
import jax
import jax.numpy as jnp
from jax.experimental import pallas as pl
from jax.experimental.pallas import tpu as pltpu

B = 2          # batch
L = 16         # sequence length (forced by fc: 64 * L/16 == 64  =>  L == 16)
C_IN = 10      # raw input channels (emb layer input)
OUT = 144      # fc output size
CONV_CH = (3, 16, 32, 32, 64)   # channels entering / leaving the 4 conv blocks


def _conv_relu_pool(h, w_im2col, b, l_per_batch, pool_ref):
    """h: (total, Cin) f32, rows stacked over batch; w_im2col: (3*Cin, Cout).

    Conv1d(kernel=3, padding=1) + ReLU + MaxPool1d(2), applied independently to
    each batch element's length-`l_per_batch` row segment -> (total//2, Cout).
    """
    total, cin = h.shape
    half = total // 2

    # Shifted row copies for conv taps k=0 (prev) and k=2 (next).
    zeros = jnp.zeros((1, cin), h.dtype)
    hp = jnp.concatenate([zeros, h, zeros], axis=0)        # (total+2, Cin)
    h_prev = hp[:total, :]                                 # row i -> h[i-1]
    h_next = hp[2:, :]                                     # row i -> h[i+1]

    # Zero rows that would leak across batch-element boundaries (conv padding).
    # l_per_batch is a power of two, so `& (l-1)` == position within segment.
    pos = jax.lax.broadcasted_iota(jnp.int32, (total, 1), 0) & (l_per_batch - 1)
    h_prev = jnp.where(pos == 0, 0.0, h_prev)
    h_next = jnp.where(pos == l_per_batch - 1, 0.0, h_next)

    # im2col: all 3 taps in one MXU push (3*Cin <= 96 < 128 lanes).
    cols = jnp.concatenate([h_prev, h, h_next], axis=1)    # (total, 3*Cin)
    pool_ref[...] = jnp.dot(cols, w_im2col,
                            preferred_element_type=jnp.float32) + b

    # MaxPool1d(2): strided even/odd row loads + one vector max.
    even = pool_ref[pl.ds(0, half, stride=2), :]
    odd = pool_ref[pl.ds(1, half, stride=2), :]
    # ReLU folded into the pool: max(relu(e), relu(o)) == max(max(e, o), 0).
    return jnp.maximum(jnp.maximum(even, odd), 0.0)


def cnn_kernel(x_ref, wemb_ref, bemb_ref,
               w1_ref, b1_ref, w2_ref, b2_ref,
               w3_ref, b3_ref, w4_ref, b4_ref,
               wfc_ref, bfc_ref, out_ref,
               p1_ref, p2_ref, p3_ref, p4_ref):
    # Embedding linear over the whole stacked batch: (B*L, 10) @ (10, 3).
    h = jnp.dot(x_ref[...], wemb_ref[...],
                preferred_element_type=jnp.float32) + bemb_ref[...]

    layers = ((w1_ref, b1_ref, p1_ref),
              (w2_ref, b2_ref, p2_ref),
              (w3_ref, b3_ref, p3_ref),
              (w4_ref, b4_ref, p4_ref))
    l = L
    for w_ref, b_ref, p_ref in layers:
        h = _conv_relu_pool(h, w_ref[...], b_ref[...], l, p_ref)
        l //= 2

    # h is now (B, 64) == out4.view(B, -1); single FC matmul for the batch.
    out = jnp.dot(h, wfc_ref[...],
                  preferred_element_type=jnp.float32) + bfc_ref[...]
    out_ref[...] = out.astype(out_ref.dtype)


def prepare_params(p):
    """One-time weight re-layout into kernel-ready shapes (hoisted from the call path)."""
    def im2col(w):  # (Cout, Cin, K) -> (K*Cin, Cout), tap-major rows
        cout, cin, k = w.shape
        return jnp.transpose(w, (2, 1, 0)).reshape(k * cin, cout)

    return (p["wemb"].T, p["bemb"][None, :],
            im2col(p["w1"]), p["b1"][None, :],
            im2col(p["w2"]), p["b2"][None, :],
            im2col(p["w3"]), p["b3"][None, :],
            im2col(p["w4"]), p["b4"][None, :],
            p["wfc"].T, p["bfc"][None, :])


@jax.jit
def cnn_forward(x, prepped):
    """x: (B, 10, L) float32 (PyTorch NCL layout). Returns (B, 144)."""
    b = x.shape[0]
    n_rows = b * L
    # channels-last, batch stacked along the row (sublane) axis: (B*L, 10)
    x_lc = jnp.transpose(x, (0, 2, 1)).reshape(n_rows, C_IN)

    vmem = pl.BlockSpec(memory_space=pltpu.MemorySpace.VMEM)
    args = (x_lc,) + tuple(prepped)
    # per-layer pooling scratch: conv output (bias added) before even/odd max
    scratch = [pltpu.VMEM((n_rows // (2 ** i), CONV_CH[i + 1]), jnp.float32)
               for i in range(4)]
    return pl.pallas_call(
        cnn_kernel,
        out_shape=jax.ShapeDtypeStruct((b, OUT), jnp.float32),
        in_specs=[vmem] * len(args),
        out_specs=vmem,
        scratch_shapes=scratch,
        # ~195 KFLOP of matmuls, ~85 KB touched; advisory only.
        cost_estimate=pl.CostEstimate(flops=200_000, transcendentals=0,
                                      bytes_accessed=90_000),
    )(*args)


def init_params(key):
    """Deterministic parameters with PyTorch module shapes (uniform +-1/sqrt(fan_in))."""
    def lin(k, out_f, in_f):
        k1, k2 = jax.random.split(k)
        bound = 1.0 / (in_f ** 0.5)
        return (jax.random.uniform(k1, (out_f, in_f), jnp.float32, -bound, bound),
                jax.random.uniform(k2, (out_f,), jnp.float32, -bound, bound))

    def conv(k, out_c, in_c, ksz=3):
        k1, k2 = jax.random.split(k)
        bound = 1.0 / ((in_c * ksz) ** 0.5)
        return (jax.random.uniform(k1, (out_c, in_c, ksz), jnp.float32, -bound, bound),
                jax.random.uniform(k2, (out_c,), jnp.float32, -bound, bound))

    ks = jax.random.split(key, 6)
    p = {}
    p["wemb"], p["bemb"] = lin(ks[0], 3, 10)
    p["w1"], p["b1"] = conv(ks[1], 16, 3)
    p["w2"], p["b2"] = conv(ks[2], 32, 16)
    p["w3"], p["b3"] = conv(ks[3], 32, 32)
    p["w4"], p["b4"] = conv(ks[4], 64, 32)
    p["wfc"], p["bfc"] = lin(ks[5], OUT, 64)
    return p


def ref_forward(x, p):
    """Pure-JAX reference following the PyTorch forward exactly (NCL layout)."""
    x_ = jnp.transpose(x, (0, 2, 1))                          # (B, L, 10)
    h = x_ @ p["wemb"].T + p["bemb"]                          # (B, L, 3)
    h = jnp.transpose(h, (0, 2, 1))                           # (B, 3, L)

    def block(h, w, b):
        y = jax.lax.conv_general_dilated(
            h, w, window_strides=(1,), padding=((1, 1),),
            dimension_numbers=("NCH", "OIH", "NCH"))
        y = jax.nn.relu(y + b[None, :, None])
        return jax.lax.reduce_window(y, -jnp.inf, jax.lax.max,
                                     (1, 1, 2), (1, 1, 2), "VALID")

    h = block(h, p["w1"], p["b1"])
    h = block(h, p["w2"], p["b2"])
    h = block(h, p["w3"], p["b3"])
    h = block(h, p["w4"], p["b4"])
    flat = h.reshape(h.shape[0], -1)                          # (B, 64)
    return flat @ p["wfc"].T + p["bfc"]


if __name__ == "__main__":
    key = jax.random.PRNGKey(0)
    kx, kp = jax.random.split(key)
    x = jax.random.normal(kx, (B, C_IN, L), dtype=jnp.float32)
    params = init_params(kp)
    prepped = prepare_params(params)          # weight re-layout done once, up front

    out = jax.block_until_ready(cnn_forward(x, prepped))
    ref = jax.block_until_ready(ref_forward(x, params))

    assert out.shape == (B, OUT), out.shape
    assert jnp.allclose(out, ref, atol=1e-4, rtol=1e-4), float(jnp.max(jnp.abs(out - ref)))
    print("KERNEL_OK")
</pallas_src>

<mosaic_0001>
module attributes {stable_mosaic.version = 11 : i64} {
  func.func @cnn_kernel(%arg0: memref<32x10xf32, #tpu.memory_space<vmem>>, %arg1: memref<10x3xf32, #tpu.memory_space<vmem>>, %arg2: memref<1x3xf32, #tpu.memory_space<vmem>>, %arg3: memref<9x16xf32, #tpu.memory_space<vmem>>, %arg4: memref<1x16xf32, #tpu.memory_space<vmem>>, %arg5: memref<48x32xf32, #tpu.memory_space<vmem>>, %arg6: memref<1x32xf32, #tpu.memory_space<vmem>>, %arg7: memref<96x32xf32, #tpu.memory_space<vmem>>, %arg8: memref<1x32xf32, #tpu.memory_space<vmem>>, %arg9: memref<96x64xf32, #tpu.memory_space<vmem>>, %arg10: memref<1x64xf32, #tpu.memory_space<vmem>>, %arg11: memref<64x144xf32, #tpu.memory_space<vmem>>, %arg12: memref<1x144xf32, #tpu.memory_space<vmem>>, %arg13: memref<2x144xf32, #tpu.memory_space<vmem>>, %arg14: memref<32x16xf32, #tpu.memory_space<vmem>>, %arg15: memref<16x32xf32, #tpu.memory_space<vmem>>, %arg16: memref<8x32xf32, #tpu.memory_space<vmem>>, %arg17: memref<4x64xf32, #tpu.memory_space<vmem>>) attributes {dimension_semantics = [], scalar_prefetch = 0 : i64, scratch_operands = 4 : i64, tpu.core_type = #tpu.core_type<tc>} {
    %c0 = arith.constant 0 : index
    %c0_0 = arith.constant 0 : index
    %0 = vector.load %arg0[%c0, %c0_0] : memref<32x10xf32, #tpu.memory_space<vmem>>, vector<32x10xf32>
    %c0_1 = arith.constant 0 : index
    %c0_2 = arith.constant 0 : index
    %1 = vector.load %arg1[%c0_1, %c0_2] : memref<10x3xf32, #tpu.memory_space<vmem>>, vector<10x3xf32>
    %cst = arith.constant dense<0.000000e+00> : vector<32x3xf32>
    %2 = tpu.matmul %0, %1, %cst {dimension_numbers = #tpu.dot_dimension_numbers<[1], [0], [0], [1], [0, 0, 1, 1], [], []>} : vector<32x10xf32>, vector<10x3xf32>, vector<32x3xf32> -> vector<32x3xf32>
    %c0_3 = arith.constant 0 : index
    %c0_4 = arith.constant 0 : index
    %3 = vector.load %arg2[%c0_3, %c0_4] : memref<1x3xf32, #tpu.memory_space<vmem>>, vector<1x3xf32>
    %4 = vector.broadcast %3 : vector<1x3xf32> to vector<32x3xf32>
    %5 = arith.addf %2, %4 : vector<32x3xf32>
    %c0_5 = arith.constant 0 : index
    %c0_6 = arith.constant 0 : index
    %6 = vector.load %arg3[%c0_5, %c0_6] : memref<9x16xf32, #tpu.memory_space<vmem>>, vector<9x16xf32>
    %c0_7 = arith.constant 0 : index
    %c0_8 = arith.constant 0 : index
    %7 = vector.load %arg4[%c0_7, %c0_8] : memref<1x16xf32, #tpu.memory_space<vmem>>, vector<1x16xf32>
    %cst_9 = arith.constant 0.000000e+00 : f32
    %8 = vector.broadcast %cst_9 : f32 to vector<1x3xf32>
    %9 = tpu.concatenate %8, %5, %8 in 0 : vector<1x3xf32>, vector<32x3xf32>, vector<1x3xf32> -> vector<34x3xf32>
    %10 = vector.extract_strided_slice %9 {offsets = [0, 0], sizes = [32, 3], strides = [1, 1]} : vector<34x3xf32> to vector<32x3xf32>
    %11 = vector.extract_strided_slice %9 {offsets = [2, 0], sizes = [32, 3], strides = [1, 1]} : vector<34x3xf32> to vector<32x3xf32>
    %12 = tpu.iota {dimensions = array<i32: 0>} : vector<32x1xi32>
    %c15_i32 = arith.constant 15 : i32
    %13 = vector.broadcast %c15_i32 : i32 to vector<32x1xi32>
    %14 = arith.andi %12, %13 : vector<32x1xi32>
    %c0_i32 = arith.constant 0 : i32
    %15 = vector.broadcast %c0_i32 : i32 to vector<32x1xi32>
    %16 = arith.cmpi eq, %14, %15 : vector<32x1xi32>
    %cst_10 = arith.constant 0.000000e+00 : f32
    %17 = vector.shape_cast %16 : vector<32x1xi1> to vector<32x1xi1>
    %18 = vector.broadcast %17 : vector<32x1xi1> to vector<32x3xi1>
    %19 = vector.broadcast %cst_10 : f32 to vector<32x3xf32>
    %20 = arith.select %18, %19, %10 : vector<32x3xi1>, vector<32x3xf32>
    %c15_i32_11 = arith.constant 15 : i32
    %21 = vector.broadcast %c15_i32_11 : i32 to vector<32x1xi32>
    %22 = arith.cmpi eq, %14, %21 : vector<32x1xi32>
    %cst_12 = arith.constant 0.000000e+00 : f32
    %23 = vector.shape_cast %22 : vector<32x1xi1> to vector<32x1xi1>
    %24 = vector.broadcast %23 : vector<32x1xi1> to vector<32x3xi1>
    %25 = vector.broadcast %cst_12 : f32 to vector<32x3xf32>
    %26 = arith.select %24, %25, %11 : vector<32x3xi1>, vector<32x3xf32>
    %27 = tpu.concatenate %20, %5, %26 in 1 : vector<32x3xf32>, vector<32x3xf32>, vector<32x3xf32> -> vector<32x9xf32>
    %cst_13 = arith.constant dense<0.000000e+00> : vector<32x16xf32>
    %28 = tpu.matmul %27, %6, %cst_13 {dimension_numbers = #tpu.dot_dimension_numbers<[1], [0], [0], [1], [0, 0, 1, 1], [], []>} : vector<32x9xf32>, vector<9x16xf32>, vector<32x16xf32> -> vector<32x16xf32>
    %29 = vector.broadcast %7 : vector<1x16xf32> to vector<32x16xf32>
    %30 = arith.addf %28, %29 : vector<32x16xf32>
    %c0_14 = arith.constant 0 : index
    %c0_15 = arith.constant 0 : index
    %31 = vector.load %arg14[%c0_14, %c0_15] : memref<32x16xf32, #tpu.memory_space<vmem>>, vector<32x16xf32>
    tpu.vector_store %arg14[%c0_14, %c0_15], %30 {strides = array<i32>} : memref<32x16xf32, #tpu.memory_space<vmem>>, vector<32x16xf32>,
    %c0_16 = arith.constant 0 : index
    %c0_17 = arith.constant 0 : index
    %32 = tpu.strided_load %arg14[%c0_16, %c0_17] {strides = array<i32: 2, 1>} : memref<32x16xf32, #tpu.memory_space<vmem>>, vector<16x16xf32>
    %c1 = arith.constant 1 : index
    %c0_18 = arith.constant 0 : index
    %33 = tpu.strided_load %arg14[%c1, %c0_18] {strides = array<i32: 2, 1>} : memref<32x16xf32, #tpu.memory_space<vmem>>, vector<16x16xf32>
    %34 = arith.maximumf %32, %33 : vector<16x16xf32>
    %cst_19 = arith.constant 0.000000e+00 : f32
    %35 = vector.broadcast %cst_19 : f32 to vector<16x16xf32>
    %36 = arith.maximumf %34, %35 : vector<16x16xf32>
    %c0_20 = arith.constant 0 : index
    %c0_21 = arith.constant 0 : index
    %37 = vector.load %arg5[%c0_20, %c0_21] : memref<48x32xf32, #tpu.memory_space<vmem>>, vector<48x32xf32>
    %c0_22 = arith.constant 0 : index
    %c0_23 = arith.constant 0 : index
    %38 = vector.load %arg6[%c0_22, %c0_23] : memref<1x32xf32, #tpu.memory_space<vmem>>, vector<1x32xf32>
    %cst_24 = arith.constant 0.000000e+00 : f32
    %39 = vector.broadcast %cst_24 : f32 to vector<1x16xf32>
    %40 = tpu.concatenate %39, %36, %39 in 0 : vector<1x16xf32>, vector<16x16xf32>, vector<1x16xf32> -> vector<18x16xf32>
    %41 = vector.extract_strided_slice %40 {offsets = [0, 0], sizes = [16, 16], strides = [1, 1]} : vector<18x16xf32> to vector<16x16xf32>
    %42 = vector.extract_strided_slice %40 {offsets = [2, 0], sizes = [16, 16], strides = [1, 1]} : vector<18x16xf32> to vector<16x16xf32>
    %43 = tpu.iota {dimensions = array<i32: 0>} : vector<16x1xi32>
    %c7_i32 = arith.constant 7 : i32
    %44 = vector.broadcast %c7_i32 : i32 to vector<16x1xi32>
    %45 = arith.andi %43, %44 : vector<16x1xi32>
    %c0_i32_25 = arith.constant 0 : i32
    %46 = vector.broadcast %c0_i32_25 : i32 to vector<16x1xi32>
    %47 = arith.cmpi eq, %45, %46 : vector<16x1xi32>
    %cst_26 = arith.constant 0.000000e+00 : f32
    %48 = vector.shape_cast %47 : vector<16x1xi1> to vector<16x1xi1>
    %49 = vector.broadcast %48 : vector<16x1xi1> to vector<16x16xi1>
    %50 = vector.broadcast %cst_26 : f32 to vector<16x16xf32>
    %51 = arith.select %49, %50, %41 : vector<16x16xi1>, vector<16x16xf32>
    %c7_i32_27 = arith.constant 7 : i32
    %52 = vector.broadcast %c7_i32_27 : i32 to vector<16x1xi32>
    %53 = arith.cmpi eq, %45, %52 : vector<16x1xi32>
    %cst_28 = arith.constant 0.000000e+00 : f32
    %54 = vector.shape_cast %53 : vector<16x1xi1> to vector<16x1xi1>
    %55 = vector.broadcast %54 : vector<16x1xi1> to vector<16x16xi1>
    %56 = vector.broadcast %cst_28 : f32 to vector<16x16xf32>
    %57 = arith.select %55, %56, %42 : vector<16x16xi1>, vector<16x16xf32>
    %58 = tpu.concatenate %51, %36, %57 in 1 : vector<16x16xf32>, vector<16x16xf32>, vector<16x16xf32> -> vector<16x48xf32>
    %cst_29 = arith.constant dense<0.000000e+00> : vector<16x32xf32>
    %59 = tpu.matmul %58, %37, %cst_29 {dimension_numbers = #tpu.dot_dimension_numbers<[1], [0], [0], [1], [0, 0, 1, 1], [], []>} : vector<16x48xf32>, vector<48x32xf32>, vector<16x32xf32> -> vector<16x32xf32>
    %60 = vector.broadcast %38 : vector<1x32xf32> to vector<16x32xf32>
    %61 = arith.addf %59, %60 : vector<16x32xf32>
    %c0_30 = arith.constant 0 : index
    %c0_31 = arith.constant 0 : index
    %62 = vector.load %arg15[%c0_30, %c0_31] : memref<16x32xf32, #tpu.memory_space<vmem>>, vector<16x32xf32>
    tpu.vector_store %arg15[%c0_30, %c0_31], %61 {strides = array<i32>} : memref<16x32xf32, #tpu.memory_space<vmem>>, vector<16x32xf32>,
    %c0_32 = arith.constant 0 : index
    %c0_33 = arith.constant 0 : index
    %63 = tpu.strided_load %arg15[%c0_32, %c0_33] {strides = array<i32: 2, 1>} : memref<16x32xf32, #tpu.memory_space<vmem>>, vector<8x32xf32>
    %c1_34 = arith.constant 1 : index
    %c0_35 = arith.constant 0 : index
    %64 = tpu.strided_load %arg15[%c1_34, %c0_35] {strides = array<i32: 2, 1>} : memref<16x32xf32, #tpu.memory_space<vmem>>, vector<8x32xf32>
    %65 = arith.maximumf %63, %64 : vector<8x32xf32>
    %cst_36 = arith.constant 0.000000e+00 : f32
    %66 = vector.broadcast %cst_36 : f32 to vector<8x32xf32>
    %67 = arith.maximumf %65, %66 : vector<8x32xf32>
    %c0_37 = arith.constant 0 : index
    %c0_38 = arith.constant 0 : index
    %68 = vector.load %arg7[%c0_37, %c0_38] : memref<96x32xf32, #tpu.memory_space<vmem>>, vector<96x32xf32>
    %c0_39 = arith.constant 0 : index
    %c0_40 = arith.constant 0 : index
    %69 = vector.load %arg8[%c0_39, %c0_40] : memref<1x32xf32, #tpu.memory_space<vmem>>, vector<1x32xf32>
    %cst_41 = arith.constant 0.000000e+00 : f32
    %70 = vector.broadcast %cst_41 : f32 to vector<1x32xf32>
    %71 = tpu.concatenate %70, %67, %70 in 0 : vector<1x32xf32>, vector<8x32xf32>, vector<1x32xf32> -> vector<10x32xf32>
    %72 = vector.extract_strided_slice %71 {offsets = [0, 0], sizes = [8, 32], strides = [1, 1]} : vector<10x32xf32> to vector<8x32xf32>
    %73 = vector.extract_strided_slice %71 {offsets = [2, 0], sizes = [8, 32], strides = [1, 1]} : vector<10x32xf32> to vector<8x32xf32>
    %74 = tpu.iota {dimensions = array<i32: 0>} : vector<8x1xi32>
    %c3_i32 = arith.constant 3 : i32
    %75 = vector.broadcast %c3_i32 : i32 to vector<8x1xi32>
    %76 = arith.andi %74, %75 : vector<8x1xi32>
    %c0_i32_42 = arith.constant 0 : i32
    %77 = vector.broadcast %c0_i32_42 : i32 to vector<8x1xi32>
    %78 = arith.cmpi eq, %76, %77 : vector<8x1xi32>
    %cst_43 = arith.constant 0.000000e+00 : f32
    %79 = vector.shape_cast %78 : vector<8x1xi1> to vector<8x1xi1>
    %80 = vector.broadcast %79 : vector<8x1xi1> to vector<8x32xi1>
    %81 = vector.broadcast %cst_43 : f32 to vector<8x32xf32>
    %82 = arith.select %80, %81, %72 : vector<8x32xi1>, vector<8x32xf32>
    %c3_i32_44 = arith.constant 3 : i32
    %83 = vector.broadcast %c3_i32_44 : i32 to vector<8x1xi32>
    %84 = arith.cmpi eq, %76, %83 : vector<8x1xi32>
    %cst_45 = arith.constant 0.000000e+00 : f32
    %85 = vector.shape_cast %84 : vector<8x1xi1> to vector<8x1xi1>
    %86 = vector.broadcast %85 : vector<8x1xi1> to vector<8x32xi1>
    %87 = vector.broadcast %cst_45 : f32 to vector<8x32xf32>
    %88 = arith.select %86, %87, %73 : vector<8x32xi1>, vector<8x32xf32>
    %89 = tpu.concatenate %82, %67, %88 in 1 : vector<8x32xf32>, vector<8x32xf32>, vector<8x32xf32> -> vector<8x96xf32>
    %cst_46 = arith.constant dense<0.000000e+00> : vector<8x32xf32>
    %90 = tpu.matmul %89, %68, %cst_46 {dimension_numbers = #tpu.dot_dimension_numbers<[1], [0], [0], [1], [0, 0, 1, 1], [], []>} : vector<8x96xf32>, vector<96x32xf32>, vector<8x32xf32> -> vector<8x32xf32>
    %91 = vector.broadcast %69 : vector<1x32xf32> to vector<8x32xf32>
    %92 = arith.addf %90, %91 : vector<8x32xf32>
    %c0_47 = arith.constant 0 : index
    %c0_48 = arith.constant 0 : index
    %93 = vector.load %arg16[%c0_47, %c0_48] : memref<8x32xf32, #tpu.memory_space<vmem>>, vector<8x32xf32>
    tpu.vector_store %arg16[%c0_47, %c0_48], %92 {strides = array<i32>} : memref<8x32xf32, #tpu.memory_space<vmem>>, vector<8x32xf32>,
    %c0_49 = arith.constant 0 : index
    %c0_50 = arith.constant 0 : index
    %94 = tpu.strided_load %arg16[%c0_49, %c0_50] {strides = array<i32: 2, 1>} : memref<8x32xf32, #tpu.memory_space<vmem>>, vector<4x32xf32>
    %c1_51 = arith.constant 1 : index
    %c0_52 = arith.constant 0 : index
    %95 = tpu.strided_load %arg16[%c1_51, %c0_52] {strides = array<i32: 2, 1>} : memref<8x32xf32, #tpu.memory_space<vmem>>, vector<4x32xf32>
    %96 = arith.maximumf %94, %95 : vector<4x32xf32>
    %cst_53 = arith.constant 0.000000e+00 : f32
    %97 = vector.broadcast %cst_53 : f32 to vector<4x32xf32>
    %98 = arith.maximumf %96, %97 : vector<4x32xf32>
    %c0_54 = arith.constant 0 : index
    %c0_55 = arith.constant 0 : index
    %99 = vector.load %arg9[%c0_54, %c0_55] : memref<96x64xf32, #tpu.memory_space<vmem>>, vector<96x64xf32>
    %c0_56 = arith.constant 0 : index
    %c0_57 = arith.constant 0 : index
    %100 = vector.load %arg10[%c0_56, %c0_57] : memref<1x64xf32, #tpu.memory_space<vmem>>, vector<1x64xf32>
    %cst_58 = arith.constant 0.000000e+00 : f32
    %101 = vector.broadcast %cst_58 : f32 to vector<1x32xf32>
    %102 = tpu.concatenate %101, %98, %101 in 0 : vector<1x32xf32>, vector<4x32xf32>, vector<1x32xf32> -> vector<6x32xf32>
    %103 = vector.extract_strided_slice %102 {offsets = [0, 0], sizes = [4, 32], strides = [1, 1]} : vector<6x32xf32> to vector<4x32xf32>
    %104 = vector.extract_strided_slice %102 {offsets = [2, 0], sizes = [4, 32], strides = [1, 1]} : vector<6x32xf32> to vector<4x32xf32>
    %105 = tpu.iota {dimensions = array<i32: 0>} : vector<4x1xi32>
    %c1_i32 = arith.constant 1 : i32
    %106 = vector.broadcast %c1_i32 : i32 to vector<4x1xi32>
    %107 = arith.andi %105, %106 : vector<4x1xi32>
    %c0_i32_59 = arith.constant 0 : i32
    %108 = vector.broadcast %c0_i32_59 : i32 to vector<4x1xi32>
    %109 = arith.cmpi eq, %107, %108 : vector<4x1xi32>
    %cst_60 = arith.constant 0.000000e+00 : f32
    %110 = vector.shape_cast %109 : vector<4x1xi1> to vector<4x1xi1>
    %111 = vector.broadcast %110 : vector<4x1xi1> to vector<4x32xi1>
    %112 = vector.broadcast %cst_60 : f32 to vector<4x32xf32>
    %113 = arith.select %111, %112, %103 : vector<4x32xi1>, vector<4x32xf32>
    %c1_i32_61 = arith.constant 1 : i32
    %114 = vector.broadcast %c1_i32_61 : i32 to vector<4x1xi32>
    %115 = arith.cmpi eq, %107, %114 : vector<4x1xi32>
    %cst_62 = arith.constant 0.000000e+00 : f32
    %116 = vector.shape_cast %115 : vector<4x1xi1> to vector<4x1xi1>
    %117 = vector.broadcast %116 : vector<4x1xi1> to vector<4x32xi1>
    %118 = vector.broadcast %cst_62 : f32 to vector<4x32xf32>
    %119 = arith.select %117, %118, %104 : vector<4x32xi1>, vector<4x32xf32>
    %120 = tpu.concatenate %113, %98, %119 in 1 : vector<4x32xf32>, vector<4x32xf32>, vector<4x32xf32> -> vector<4x96xf32>
    %cst_63 = arith.constant dense<0.000000e+00> : vector<4x64xf32>
    %121 = tpu.matmul %120, %99, %cst_63 {dimension_numbers = #tpu.dot_dimension_numbers<[1], [0], [0], [1], [0, 0, 1, 1], [], []>} : vector<4x96xf32>, vector<96x64xf32>, vector<4x64xf32> -> vector<4x64xf32>
    %122 = vector.broadcast %100 : vector<1x64xf32> to vector<4x64xf32>
    %123 = arith.addf %121, %122 : vector<4x64xf32>
    %c0_64 = arith.constant 0 : index
    %c0_65 = arith.constant 0 : index
    %124 = vector.load %arg17[%c0_64, %c0_65] : memref<4x64xf32, #tpu.memory_space<vmem>>, vector<4x64xf32>
    tpu.vector_store %arg17[%c0_64, %c0_65], %123 {strides = array<i32>} : memref<4x64xf32, #tpu.memory_space<vmem>>, vector<4x64xf32>,
    %c0_66 = arith.constant 0 : index
    %c0_67 = arith.constant 0 : index
    %125 = tpu.strided_load %arg17[%c0_66, %c0_67] {strides = array<i32: 2, 1>} : memref<4x64xf32, #tpu.memory_space<vmem>>, vector<2x64xf32>
    %c1_68 = arith.constant 1 : index
    %c0_69 = arith.constant 0 : index
    %126 = tpu.strided_load %arg17[%c1_68, %c0_69] {strides = array<i32: 2, 1>} : memref<4x64xf32, #tpu.memory_space<vmem>>, vector<2x64xf32>
    %127 = arith.maximumf %125, %126 : vector<2x64xf32>
    %cst_70 = arith.constant 0.000000e+00 : f32
    %128 = vector.broadcast %cst_70 : f32 to vector<2x64xf32>
    %129 = arith.maximumf %127, %128 : vector<2x64xf32>
    %c0_71 = arith.constant 0 : index
    %c0_72 = arith.constant 0 : index
    %130 = vector.load %arg11[%c0_71, %c0_72] : memref<64x144xf32, #tpu.memory_space<vmem>>, vector<64x144xf32>
    %cst_73 = arith.constant dense<0.000000e+00> : vector<2x144xf32>
    %131 = tpu.matmul %129, %130, %cst_73 {dimension_numbers = #tpu.dot_dimension_numbers<[1], [0], [0], [1], [0, 0, 1, 1], [], []>} : vector<2x64xf32>, vector<64x144xf32>, vector<2x144xf32> -> vector<2x144xf32>
    %c0_74 = arith.constant 0 : index
    %c0_75 = arith.constant 0 : index
    %132 = vector.load %arg12[%c0_74, %c0_75] : memref<1x144xf32, #tpu.memory_space<vmem>>, vector<1x144xf32>
    %133 = vector.broadcast %132 : vector<1x144xf32> to vector<2x144xf32>
    %134 = arith.addf %131, %133 : vector<2x144xf32>
    %c0_76 = arith.constant 0 : index
    %c0_77 = arith.constant 0 : index
    %135 = vector.load %arg13[%c0_76, %c0_77] : memref<2x144xf32, #tpu.memory_space<vmem>>, vector<2x144xf32>
    tpu.vector_store %arg13[%c0_76, %c0_77], %134 {strides = array<i32>} : memref<2x144xf32, #tpu.memory_space<vmem>>, vector<2x144xf32>,
    return
  }
}

</mosaic_0001>

<llo_original>
// kernel: cnn_forward.1
$region0: #{cnn_forward.1}
  #allocation0 [shape = 'u32[]', space=smem, size = 0x4, offset = 0x4, fixed_abs, tag = 'smem constant byte address 0x4 - core index']
  #allocation1 [shape = 'u32[144,128]{1,0:T(1,128)}', space=vmem, size = 0x12000, scoped, tag = 'internal scratch']
  #allocation2 [shape = 'f32[32,16]{1,0:T(8,128)}', space=vmem, size = 0x4000, scoped, tag = 'scratch operand']
  #allocation3 [shape = 'f32[16,32]{1,0:T(8,128)}', space=vmem, size = 0x2000, scoped, tag = 'scratch operand']
  #allocation4 [shape = 'f32[8,32]{1,0:T(8,128)}', space=vmem, size = 0x1000, scoped, tag = 'scratch operand']
  #allocation5 [shape = 'f32[4,64]{1,0:T(4,128)}', space=vmem, size = 0x800, scoped, tag = 'scratch operand']
  %s0 = inlined_call_operand.vmem [shape: f32[32,10], index: 0, kind: input, shape index: {}]
  %s1 = inlined_call_operand.vmem [shape: f32[10,3], index: 1, kind: input, shape index: {}]
  %s2 = inlined_call_operand.vmem [shape: f32[1,3], index: 2, kind: input, shape index: {}]
  %s3 = inlined_call_operand.vmem [shape: f32[9,16], index: 3, kind: input, shape index: {}]
  %s4 = inlined_call_operand.vmem [shape: f32[1,16], index: 4, kind: input, shape index: {}]
  %s5 = inlined_call_operand.vmem [shape: f32[48,32], index: 5, kind: input, shape index: {}]
  %s6 = inlined_call_operand.vmem [shape: f32[1,32], index: 6, kind: input, shape index: {}]
  %s7 = inlined_call_operand.vmem [shape: f32[96,32], index: 7, kind: input, shape index: {}]
  %s8 = inlined_call_operand.vmem [shape: f32[1,32], index: 8, kind: input, shape index: {}]
  %s9 = inlined_call_operand.vmem [shape: f32[96,64], index: 9, kind: input, shape index: {}]
  %s10 = inlined_call_operand.vmem [shape: f32[1,64], index: 10, kind: input, shape index: {}]
  %s11 = inlined_call_operand.vmem [shape: f32[64,144], index: 11, kind: input, shape index: {}]
  %s12 = inlined_call_operand.vmem [shape: f32[1,144], index: 12, kind: input, shape index: {}]
  %s13 = inlined_call_operand.hbm [shape: f32[2,144], index: 13, kind: output, shape index: {}]
  %s14 = sld [smem:[#allocation0]]
  $region62: #{cnn_forward.1} parent=0
    _
  %s16 = ssub.s32 1, %s14
  %s17 = scalar_select 0, %s16, %s14
  $region1: #{cnn_forward.1} parent=0
    #allocation6 [shape = 'u8[2048]{0}', space=vmem, size = 0x800, scoped, tag = 'output window, operand 0, single buffered']
    #allocation7 [shape = 's32[1]{0}', space=sflag, size = 0x4, scoped, tag = 'scoped memory for cnn_forward.1']
    %18 = vsyncpa [#allocation7], 0
    // Predicated region
    $region2: #{cnn_forward.1} parent=1 // pred_check
      _
    $region3: #{cnn_forward.1} parent=1 // pred_check_branch
      %20 = sbr.rel (0) target = $region5
    $region4: #{cnn_forward.1} parent=1 // pred_region
      _
    $region5: #{cnn_forward.1} parent=1 // pred_fallthru
      _
    // Predicated region
    $region6: #{cnn_forward.1} parent=1 // pred_check
      _
    $region7: #{cnn_forward.1} parent=1 // pred_check_branch
      %22 = sbr.rel (0) target = $region9
    $region8: #{cnn_forward.1} parent=1 // pred_region
      _
    $region9: #{cnn_forward.1} parent=1 // pred_fallthru
      _
    // Predicated region
    $region10: #{cnn_forward.1} parent=1 // pred_check
      _
    $region11: #{cnn_forward.1} parent=1 // pred_check_branch
      %24 = sbr.rel (0) target = $region13
    $region12: #{cnn_forward.1} parent=1 // pred_region
      _
    $region13: #{cnn_forward.1} parent=1 // pred_fallthru
      _
    // Predicated region
    $region14: #{cnn_forward.1} parent=1 // pred_check
      _
    $region15: #{cnn_forward.1} parent=1 // pred_check_branch
      %26 = sbr.rel (0) target = $region17
    $region16: #{cnn_forward.1} parent=1 // pred_region
      _
    $region17: #{cnn_forward.1} parent=1 // pred_fallthru
      _
    // Predicated region
    $region18: #{cnn_forward.1} parent=1 // pred_check
      _
    $region19: #{cnn_forward.1} parent=1 // pred_check_branch
      %28 = sbr.rel (0) target = $region21
    $region20: #{cnn_forward.1} parent=1 // pred_region
      _
    $region21: #{cnn_forward.1} parent=1 // pred_fallthru
      _
    // Predicated region
    $region22: #{cnn_forward.1} parent=1 // pred_check
      _
    $region23: #{cnn_forward.1} parent=1 // pred_check_branch
      %30 = sbr.rel (0) target = $region25
    $region24: #{cnn_forward.1} parent=1 // pred_region
      _
    $region25: #{cnn_forward.1} parent=1 // pred_fallthru
      _
    // Predicated region
    $region26: #{cnn_forward.1} parent=1 // pred_check
      _
    $region27: #{cnn_forward.1} parent=1 // pred_check_branch
      %32 = sbr.rel (0) target = $region29
    $region28: #{cnn_forward.1} parent=1 // pred_region
      _
    $region29: #{cnn_forward.1} parent=1 // pred_fallthru
      _
    // Predicated region
    $region30: #{cnn_forward.1} parent=1 // pred_check
      _
    $region31: #{cnn_forward.1} parent=1 // pred_check_branch
      %34 = sbr.rel (0) target = $region33
    $region32: #{cnn_forward.1} parent=1 // pred_region
      _
    $region33: #{cnn_forward.1} parent=1 // pred_fallthru
      _
    // Predicated region
    $region34: #{cnn_forward.1} parent=1 // pred_check
      _
    $region35: #{cnn_forward.1} parent=1 // pred_check_branch
      %36 = sbr.rel (0) target = $region37
    $region36: #{cnn_forward.1} parent=1 // pred_region
      _
    $region37: #{cnn_forward.1} parent=1 // pred_fallthru
      _
    // Predicated region
    $region38: #{cnn_forward.1} parent=1 // pred_check
      _
    $region39: #{cnn_forward.1} parent=1 // pred_check_branch
      %38 = sbr.rel (0) target = $region41
    $region40: #{cnn_forward.1} parent=1 // pred_region
      _
    $region41: #{cnn_forward.1} parent=1 // pred_fallthru
      _
    // Predicated region
    $region42: #{cnn_forward.1} parent=1 // pred_check
      _
    $region43: #{cnn_forward.1} parent=1 // pred_check_branch
      %40 = sbr.rel (0) target = $region45
    $region44: #{cnn_forward.1} parent=1 // pred_region
      _
    $region45: #{cnn_forward.1} parent=1 // pred_fallthru
      _
    // Predicated region
    $region46: #{cnn_forward.1} parent=1 // pred_check
      _
    $region47: #{cnn_forward.1} parent=1 // pred_check_branch
      %42 = sbr.rel (0) target = $region49
    $region48: #{cnn_forward.1} parent=1 // pred_region
      _
    $region49: #{cnn_forward.1} parent=1 // pred_fallthru
      _
    // Predicated region
    $region50: #{cnn_forward.1} parent=1 // pred_check
      _
    $region51: #{cnn_forward.1} parent=1 // pred_check_branch
      %44 = sbr.rel (0) target = $region53
    $region52: #{cnn_forward.1} parent=1 // pred_region
      _
    $region53: #{cnn_forward.1} parent=1 // pred_fallthru
      _
    %v45 = vld [vmem:[%s0] sm:$0xff]
    %v46 = vld [vmem:[%s0 + $0x8] sm:$0xff]
    %v47 = vld [vmem:[%s0 + $0x10] sm:$0xff]
    %v48 = vld [vmem:[%s0 + $0x18] sm:$0xff]
    %v49 = vld [vmem:[%s1] sm:$0xff]
    %v50 = vld [vmem:[%s1 + $0x8] sm:$0x3]
    %v51 = vld [vmem:[%s2] sm:$0x1]
    %v53 = vlaneseq
    %v54 = vshrl.u32 %v53, 7
    %v55 = vsub.s32 0, %v54
    %v56 = vrot.slane %v51, %v55
    %vm58 = vcmask 80896
    %v60 = vsel %vm58, %v45, 0
    %v63 = vsel %vm58, %v46, 0
    %v66 = vsel %vm58, %v47, 0
    %v69 = vsel %vm58, %v48, 0
    %vm71 = vcmask 1041408
    %v73 = vsel %vm71, %v50, 0
    %75 = vmatprep.subr.mxu0 0.0
    %76 = vmatpush1.msra.mxu0 %v49
    %77 = vmatprep.subr.mxu0 0.0
    %78 = vmatpush1.msra.mxu0 %v73
    %79 = vmatprep.subr.mxu0 0.0
    %80 = vmatpush1.msra.mxu0 0.0
    %81 = vmatprep.subr.mxu0 0.0
    %82 = vmatpush1.msra.mxu0 0.0
    %83 = vmatprep.subr.mxu0 0.0
    %84 = vmatpush1.msra.mxu0 0.0
    %85 = vmatprep.subr.mxu0 0.0
    %86 = vmatpush1.msra.mxu0 0.0
    %87 = vmatprep.subr.mxu0 0.0
    %88 = vmatpush1.msra.mxu0 0.0
    %89 = vmatprep.subr.mxu0 0.0
    %90 = vmatpush1.msra.mxu0 0.0
    %91 = vmatprep.subr.mxu0 0.0
    %92 = vmatpush1.msra.mxu0 0.0
    %93 = vmatprep.subr.mxu0 0.0
    %94 = vmatpush1.msra.mxu0 0.0
    %95 = vmatprep.subr.mxu0 0.0
    %96 = vmatpush1.msra.mxu0 0.0
    %97 = vmatprep.subr.mxu0 0.0
    %98 = vmatpush1.msra.mxu0 0.0
    %99 = vmatprep.subr.mxu0 0.0
    %100 = vmatpush1.msra.mxu0 0.0
    %101 = vmatprep.subr.mxu0 0.0
    %102 = vmatpush1.msra.mxu0 0.0
    %103 = vmatprep.subr.mxu0 0.0
    %104 = vmatpush1.msra.mxu0 0.0
    %105 = vmatprep.subr.mxu0 0.0
    %106 = vmatpush1.msra.mxu0 0.0
    %107 = vmatprep.subr.mxu0 0.0
    %108 = vmatpush1.msra.mxu0 0.0
    %109 = vmatprep.subr.mxu0 0.0
    %110 = vmatpush1.msra.mxu0 0.0
    %111 = vmatprep.subr.mxu0 0.0
    %112 = vmatpush1.msra.mxu0 0.0
    %113 = vmatprep.subr.mxu0 0.0
    %114 = vmatpush1.msra.mxu0 0.0
    %115 = vmatprep.subr.mxu0 0.0
    %116 = vmatpush1.msra.mxu0 0.0
    %117 = vmatprep.subr.mxu0 0.0
    %118 = vmatpush1.msra.mxu0 0.0
    %119 = vmatprep.subr.mxu0 0.0
    %120 = vmatpush1.msra.mxu0 0.0
    %121 = vmatprep.subr.mxu0 0.0
    %122 = vmatpush1.msra.mxu0 0.0
    %123 = vmatprep.subr.mxu0 0.0
    %124 = vmatpush1.msra.mxu0 0.0
    %125 = vmatprep.subr.mxu0 0.0
    %126 = vmatpush1.msra.mxu0 0.0
    %127 = vmatprep.subr.mxu0 0.0
    %128 = vmatpush1.msra.mxu0 0.0
    %129 = vmatprep.subr.mxu0 0.0
    %130 = vmatpush1.msra.mxu0 0.0
    %131 = vmatprep.subr.mxu0 0.0
    %132 = vmatpush1.msra.mxu0 0.0
    %133 = vmatprep.subr.mxu0 0.0
    %134 = vmatpush1.msra.mxu0 0.0
    %135 = vmatprep.subr.mxu0 0.0
    %136 = vmatpush1.msra.mxu0 0.0
    %137 = vmatprep.subr.mxu0 0.0
    %138 = vmatpush1.msra.mxu0 0.0
    %139 = vmatprep.mubr.f32.mxu0 0.0
    %140 = vmatmul.mubr.f32.gmra.mrb[0].mxu0 %v60
    %v141 = vpop.f32.mrb[0].mxu0
    %v142 = vadd.f32 %v56, %v141
    %v143 = vpop.f32.mrb[0].mxu0
    %144 = vmatprep.mubr.f32.mxu0 0.0
    %145 = vmatmul.mubr.f32.gmra.mrb[0].mxu0 %v63
    %v146 = vpop.f32.mrb[0].mxu0
    %v147 = vadd.f32 %v56, %v146
    %v148 = vpop.f32.mrb[0].mxu0
    %149 = vmatprep.mubr.f32.mxu0 0.0
    %150 = vmatmul.mubr.f32.gmra.mrb[0].mxu0 %v66
    %v151 = vpop.f32.mrb[0].mxu0
    %v152 = vadd.f32 %v56, %v151
    %v153 = vpop.f32.mrb[0].mxu0
    %154 = vmatprep.mubr.f32.mxu0 0.0
    %155 = vmatmul.mubr.f32.gmra.mrb[0].mxu0 %v69
    %v156 = vpop.f32.mrb[0].mxu0
    %v157 = vadd.f32 %v56, %v156
    %v158 = vpop.f32.mrb[0].mxu0
    %159 = vdwg.mxu0
    %v160 = vld [vmem:[%s3] sm:$0xff]
    %v161 = vld [vmem:[%s3 + $0x8] sm:$0x1]
    %v162 = vld [vmem:[%s4] sm:$0x1]
    %vm167 = vcmask 1040384
    %v168 = vrot.slane %v142, 7
    %v169 = vrot.slane %v147, 7
    %v170 = vsel %vm167, %v168, %v169
    %v171 = vrot.slane %v152, 7
    %v172 = vsel %vm167, %v169, %v171
    %v173 = vrot.slane %v157, 7
    %v174 = vsel %vm167, %v171, %v173
    %v180 = vsel %vm167, 0.0, %v168
    %v181 = vsel %vm167, %v173, 0.0
    %v182 = vlaneseq
    %v183 = vshrl.u32 %v182, 7
    %v184 = vadd.s32 %v183, 8
    %v185 = vadd.s32 %v183, 16
    %v186 = vadd.s32 %v183, 24
    %v187 = vand.u32 %v183, 15
    %v188 = vand.u32 %v184, 15
    %v189 = vand.u32 %v185, 15
    %v190 = vand.u32 %v186, 15
    %vm191 = vcmp.eq.s32.totalorder %v187, 0
    %vm192 = vcmp.eq.s32.totalorder %v188, 0
    %vm193 = vcmp.eq.s32.totalorder %v189, 0
    %vm194 = vcmp.eq.s32.totalorder %v190, 0
    %v195 = vsel %vm191, 1, 0
    %v196 = vsel %vm192, 1, 0
    %v197 = vsel %vm193, 1, 0
    %v198 = vsel %vm194, 1, 0
    %vm199 = vcmp.eq.s32.totalorder %v195, 1
    %vm200 = vcmp.eq.s32.totalorder %v196, 1
    %vm201 = vcmp.eq.s32.totalorder %v197, 1
    %vm202 = vcmp.eq.s32.totalorder %v198, 1
    %v203 = vsel %vm199, 0.0, %v180
    %v204 = vsel %vm200, 0.0, %v170
    %v205 = vsel %vm201, 0.0, %v172
    %v206 = vsel %vm202, 0.0, %v174
    %vm207 = vcmp.eq.s32.totalorder %v187, 15
    %vm208 = vcmp.eq.s32.totalorder %v188, 15
    %vm209 = vcmp.eq.s32.totalorder %v189, 15
    %vm210 = vcmp.eq.s32.totalorder %v190, 15
    %v211 = vsel %vm207, 1, 0
    %v212 = vsel %vm208, 1, 0
    %v213 = vsel %vm209, 1, 0
    %v214 = vsel %vm210, 1, 0
    %vm215 = vcmp.eq.s32.totalorder %v211, 1
    %vm216 = vcmp.eq.s32.totalorder %v212, 1
    %vm217 = vcmp.eq.s32.totalorder %v213, 1
    %vm218 = vcmp.eq.s32.totalorder %v214, 1
    %vm221 = vcmask 1045504
    %v222 = vrot.slane %v180, 2
    %v223 = vrot.slane %v170, 2
    %v224 = vsel %vm221, %v222, %v223
    %v225 = vrot.slane %v172, 2
    %v226 = vsel %vm221, %v223, %v225
    %v227 = vrot.slane %v174, 2
    %v228 = vsel %vm221, %v225, %v227
    %v229 = vrot.slane %v181, 2
    %v230 = vsel %vm221, %v227, %v229
    %v235 = vsel %vm215, 0.0, %v224
    %v236 = vsel %vm216, 0.0, %v226
    %v237 = vsel %vm217, 0.0, %v228
    %v238 = vsel %vm218, 0.0, %v230
    %239 = vrot.lane.b32.xlu0 %v142, 3
    %v240 = vpop.permute.xlu0 %239
    %241 = vrot.lane.b32.xlu0 %v147, 3
    %v242 = vpop.permute.xlu0 %241
    %243 = vrot.lane.b32.xlu0 %v152, 3
    %v244 = vpop.permute.xlu0 %243
    %245 = vrot.lane.b32.xlu0 %v157, 3
    %v246 = vpop.permute.xlu0 %245
    %255 = vrot.lane.b32.xlu0 %v235, 6
    %v256 = vpop.permute.xlu0 %255
    %257 = vrot.lane.b32.xlu0 %v236, 6
    %v258 = vpop.permute.xlu0 %257
    %259 = vrot.lane.b32.xlu0 %v237, 6
    %v260 = vpop.permute.xlu0 %259
    %261 = vrot.lane.b32.xlu0 %v238, 6
    %v262 = vpop.permute.xlu0 %261
    %vm267 = vcmask 23552
    %v268 = vsel %vm267, %v203, %v240
    %v269 = vsel %vm267, %v204, %v242
    %v270 = vsel %vm267, %v205, %v244
    %v271 = vsel %vm267, %v206, %v246
    %vm272 = vcmask 48128
    %v273 = vsel %vm272, %v268, %v256
    %v274 = vsel %vm272, %v269, %v258
    %v275 = vsel %vm272, %v270, %v260
    %v276 = vsel %vm272, %v271, %v262
    %v278 = vlaneseq
    %v279 = vshrl.u32 %v278, 7
    %v280 = vsub.s32 0, %v279
    %v281 = vrot.slane %v162, %v280
    %vm283 = vcmask 72704
    %v285 = vsel %vm283, %v273, 0
    %v288 = vsel %vm283, %v274, 0
    %v291 = vsel %vm283, %v275, 0
    %v294 = vsel %vm283, %v276, 0
    %v297 = vsel %vm167, %v161, 0
    %299 = vmatprep.subr.mxu0 0.0
    %300 = vmatpush1.msra.mxu0 %v160
    %301 = vmatprep.subr.mxu0 0.0
    %302 = vmatpush1.msra.mxu0 %v297
    %303 = vmatprep.subr.mxu0 0.0
    %304 = vmatpush1.msra.mxu0 0.0
    %305 = vmatprep.subr.mxu0 0.0
    %306 = vmatpush1.msra.mxu0 0.0
    %307 = vmatprep.subr.mxu0 0.0
    %308 = vmatpush1.msra.mxu0 0.0
    %309 = vmatprep.subr.mxu0 0.0
    %310 = vmatpush1.msra.mxu0 0.0
    %311 = vmatprep.subr.mxu0 0.0
    %312 = vmatpush1.msra.mxu0 0.0
    %313 = vmatprep.subr.mxu0 0.0
    %314 = vmatpush1.msra.mxu0 0.0
    %315 = vmatprep.subr.mxu0 0.0
    %316 = vmatpush1.msra.mxu0 0.0
    %317 = vmatprep.subr.mxu0 0.0
    %318 = vmatpush1.msra.mxu0 0.0
    %319 = vmatprep.subr.mxu0 0.0
    %320 = vmatpush1.msra.mxu0 0.0
    %321 = vmatprep.subr.mxu0 0.0
    %322 = vmatpush1.msra.mxu0 0.0
    %323 = vmatprep.subr.mxu0 0.0
    %324 = vmatpush1.msra.mxu0 0.0
    %325 = vmatprep.subr.mxu0 0.0
    %326 = vmatpush1.msra.mxu0 0.0
    %327 = vmatprep.subr.mxu0 0.0
    %328 = vmatpush1.msra.mxu0 0.0
    %329 = vmatprep.subr.mxu0 0.0
    %330 = vmatpush1.msra.mxu0 0.0
    %331 = vmatprep.subr.mxu0 0.0
    %332 = vmatpush1.msra.mxu0 0.0
    %333 = vmatprep.subr.mxu0 0.0
    %334 = vmatpush1.msra.mxu0 0.0
    %335 = vmatprep.subr.mxu0 0.0
    %336 = vmatpush1.msra.mxu0 0.0
    %337 = vmatprep.subr.mxu0 0.0
    %338 = vmatpush1.msra.mxu0 0.0
    %339 = vmatprep.subr.mxu0 0.0
    %340 = vmatpush1.msra.mxu0 0.0
    %341 = vmatprep.subr.mxu0 0.0
    %342 = vmatpush1.msra.mxu0 0.0
    %343 = vmatprep.subr.mxu0 0.0
    %344 = vmatpush1.msra.mxu0 0.0
    %345 = vmatprep.subr.mxu0 0.0
    %346 = vmatpush1.msra.mxu0 0.0
    %347 = vmatprep.subr.mxu0 0.0
    %348 = vmatpush1.msra.mxu0 0.0
    %349 = vmatprep.subr.mxu0 0.0
    %350 = vmatpush1.msra.mxu0 0.0
    %351 = vmatprep.subr.mxu0 0.0
    %352 = vmatpush1.msra.mxu0 0.0
    %353 = vmatprep.subr.mxu0 0.0
    %354 = vmatpush1.msra.mxu0 0.0
    %355 = vmatprep.subr.mxu0 0.0
    %356 = vmatpush1.msra.mxu0 0.0
    %357 = vmatprep.subr.mxu0 0.0
    %358 = vmatpush1.msra.mxu0 0.0
    %359 = vmatprep.subr.mxu0 0.0
    %360 = vmatpush1.msra.mxu0 0.0
    %361 = vmatprep.subr.mxu0 0.0
    %362 = vmatpush1.msra.mxu0 0.0
    %363 = vmatprep.mubr.f32.mxu0 0.0
    %364 = vmatmul.mubr.f32.gmra.mrb[0].mxu0 %v285
    %v365 = vpop.f32.mrb[0].mxu0
    %v366 = vadd.f32 %v281, %v365
    %v367 = vpop.f32.mrb[0].mxu0
    %368 = vmatprep.mubr.f32.mxu0 0.0
    %369 = vmatmul.mubr.f32.gmra.mrb[0].mxu0 %v288
    %v370 = vpop.f32.mrb[0].mxu0
    %v371 = vadd.f32 %v281, %v370
    %v372 = vpop.f32.mrb[0].mxu0
    %373 = vmatprep.mubr.f32.mxu0 0.0
    %374 = vmatmul.mubr.f32.gmra.mrb[0].mxu0 %v291
    %v375 = vpop.f32.mrb[0].mxu0
    %v376 = vadd.f32 %v281, %v375
    %v377 = vpop.f32.mrb[0].mxu0
    %378 = vmatprep.mubr.f32.mxu0 0.0
    %379 = vmatmul.mubr.f32.gmra.mrb[0].mxu0 %v294
    %v380 = vpop.f32.mrb[0].mxu0
    %v381 = vadd.f32 %v281, %v380
    %v382 = vpop.f32.mrb[0].mxu0
    %383 = vdwg.mxu0
    %vm384 = vcmask 130048
    %385 = vst.msk [vmem:[#allocation2] sm:$0xff] %vm384, %v366
    %386 = vst.msk [vmem:[#allocation2 + $0x8] sm:$0xff] %vm384, %v371
    %387 = vst.msk [vmem:[#allocation2 + $0x10] sm:$0xff] %vm384, %v376
    %388 = vst.msk [vmem:[#allocation2 + $0x18] sm:$0xff] %vm384, %v381
    %v389 = vld [vmem:[#allocation2] ss:$2 sm:$0xff]
    %s390 = scalar_lea.vmem [#allocation2], 16
    %v391 = vld [vmem:[%s390] ss:$2 sm:$0xff]
    %s392 = scalar_lea.vmem [#allocation2], 1
    %v393 = vld [vmem:[%s392] ss:$2 sm:$0xff]
    %s394 = scalar_lea.vmem [#allocation2], 17
    %v395 = vld [vmem:[%s394] ss:$2 sm:$0xff]
    %v396 = vmax.f32 %v389, %v393
    %v397 = vmax.f32 %v391, %v395
    %v398 = vmax.f32 %v396, 0.0
    %v399 = vmax.f32 %v397, 0.0
    %v400 = vld [vmem:[%s5] sm:$0xff]
    %v401 = vld [vmem:[%s5 + $0x8] sm:$0xff]
    %v402 = vld [vmem:[%s5 + $0x10] sm:$0xff]
    %v403 = vld [vmem:[%s5 + $0x18] sm:$0xff]
    %v404 = vld [vmem:[%s5 + $0x20] sm:$0xff]
    %v405 = vld [vmem:[%s5 + $0x28] sm:$0xff]
    %v406 = vld [vmem:[%s6] sm:$0x1]
    %v409 = vrot.slane %v398, 7
    %v410 = vrot.slane %v399, 7
    %v411 = vsel %vm167, %v409, %v410
    %v415 = vsel %vm167, 0.0, %v409
    %v416 = vsel %vm167, %v410, 0.0
    %v417 = vand.u32 %v183, 7
    %v418 = vand.u32 %v184, 7
    %vm419 = vcmp.eq.s32.totalorder %v417, 0
    %vm420 = vcmp.eq.s32.totalorder %v418, 0
    %v421 = vsel %vm419, 1, 0
    %v422 = vsel %vm420, 1, 0
    %vm423 = vcmp.eq.s32.totalorder %v421, 1
    %vm424 = vcmp.eq.s32.totalorder %v422, 1
    %v425 = vsel %vm423, 0.0, %v415
    %v426 = vsel %vm424, 0.0, %v411
    %vm427 = vcmp.eq.s32.totalorder %v417, 7
    %vm428 = vcmp.eq.s32.totalorder %v418, 7
    %v429 = vsel %vm427, 1, 0
    %v430 = vsel %vm428, 1, 0
    %vm431 = vcmp.eq.s32.totalorder %v429, 1
    %vm432 = vcmp.eq.s32.totalorder %v430, 1
    %v435 = vrot.slane %v415, 2
    %v436 = vrot.slane %v411, 2
    %v437 = vsel %vm221, %v435, %v436
    %v438 = vrot.slane %v416, 2
    %v439 = vsel %vm221, %v436, %v438
    %v442 = vsel %vm431, 0.0, %v437
    %v443 = vsel %vm432, 0.0, %v439
    %444 = vrot.lane.b32.xlu0 %v398, 16
    %v445 = vpop.permute.xlu0 %444
    %446 = vrot.lane.b32.xlu0 %v399, 16
    %v447 = vpop.permute.xlu0 %446
    %452 = vrot.lane.b32.xlu0 %v442, 32
    %v453 = vpop.permute.xlu0 %452
    %454 = vrot.lane.b32.xlu0 %v443, 32
    %v455 = vpop.permute.xlu0 %454
    %v458 = vsel %vm384, %v425, %v445
    %v459 = vsel %vm384, %v426, %v447
    %vm460 = vcmask 261120
    %v461 = vsel %vm460, %v458, %v453
    %v462 = vsel %vm460, %v459, %v455
    %v464 = vlaneseq
    %v465 = vshrl.u32 %v464, 7
    %v466 = vsub.s32 0, %v465
    %v467 = vrot.slane %v406, %v466
    %vm469 = vcmask 392192
    %v471 = vsel %vm469, %v461, 0
    %v474 = vsel %vm469, %v462, 0
    %476 = vmatprep.subr.mxu0 0.0
    %477 = vmatpush1.msra.mxu0 %v400
    %478 = vmatprep.subr.mxu0 0.0
    %479 = vmatpush1.msra.mxu0 %v401
    %480 = vmatprep.subr.mxu0 0.0
    %481 = vmatpush1.msra.mxu0 %v402
    %482 = vmatprep.subr.mxu0 0.0
    %483 = vmatpush1.msra.mxu0 %v403
    %484 = vmatprep.subr.mxu0 0.0
    %485 = vmatpush1.msra.mxu0 %v404
    %486 = vmatprep.subr.mxu0 0.0
    %487 = vmatpush1.msra.mxu0 %v405
    %488 = vmatprep.subr.mxu0 0.0
    %489 = vmatpush1.msra.mxu0 0.0
    %490 = vmatprep.subr.mxu0 0.0
    %491 = vmatpush1.msra.mxu0 0.0
    %492 = vmatprep.subr.mxu0 0.0
    %493 = vmatpush1.msra.mxu0 0.0
    %494 = vmatprep.subr.mxu0 0.0
    %495 = vmatpush1.msra.mxu0 0.0
    %496 = vmatprep.subr.mxu0 0.0
    %497 = vmatpush1.msra.mxu0 0.0
    %498 = vmatprep.subr.mxu0 0.0
    %499 = vmatpush1.msra.mxu0 0.0
    %500 = vmatprep.subr.mxu0 0.0
    %501 = vmatpush1.msra.mxu0 0.0
    %502 = vmatprep.subr.mxu0 0.0
    %503 = vmatpush1.msra.mxu0 0.0
    %504 = vmatprep.subr.mxu0 0.0
    %505 = vmatpush1.msra.mxu0 0.0
    %506 = vmatprep.subr.mxu0 0.0
    %507 = vmatpush1.msra.mxu0 0.0
    %508 = vmatprep.subr.mxu0 0.0
    %509 = vmatpush1.msra.mxu0 0.0
    %510 = vmatprep.subr.mxu0 0.0
    %511 = vmatpush1.msra.mxu0 0.0
    %512 = vmatprep.subr.mxu0 0.0
    %513 = vmatpush1.msra.mxu0 0.0
    %514 = vmatprep.subr.mxu0 0.0
    %515 = vmatpush1.msra.mxu0 0.0
    %516 = vmatprep.subr.mxu0 0.0
    %517 = vmatpush1.msra.mxu0 0.0
    %518 = vmatprep.subr.mxu0 0.0
    %519 = vmatpush1.msra.mxu0 0.0
    %520 = vmatprep.subr.mxu0 0.0
    %521 = vmatpush1.msra.mxu0 0.0
    %522 = vmatprep.subr.mxu0 0.0
    %523 = vmatpush1.msra.mxu0 0.0
    %524 = vmatprep.subr.mxu0 0.0
    %525 = vmatpush1.msra.mxu0 0.0
    %526 = vmatprep.subr.mxu0 0.0
    %527 = vmatpush1.msra.mxu0 0.0
    %528 = vmatprep.subr.mxu0 0.0
    %529 = vmatpush1.msra.mxu0 0.0
    %530 = vmatprep.subr.mxu0 0.0
    %531 = vmatpush1.msra.mxu0 0.0
    %532 = vmatprep.subr.mxu0 0.0
    %533 = vmatpush1.msra.mxu0 0.0
    %534 = vmatprep.subr.mxu0 0.0
    %535 = vmatpush1.msra.mxu0 0.0
    %536 = vmatprep.subr.mxu0 0.0
    %537 = vmatpush1.msra.mxu0 0.0
    %538 = vmatprep.subr.mxu0 0.0
    %539 = vmatpush1.msra.mxu0 0.0
    %540 = vmatprep.mubr.f32.mxu0 0.0
    %541 = vmatmul.mubr.f32.gmra.mrb[0].mxu0 %v471
    %v542 = vpop.f32.mrb[0].mxu0
    %v543 = vadd.f32 %v467, %v542
    %v544 = vpop.f32.mrb[0].mxu0
    %545 = vmatprep.mubr.f32.mxu0 0.0
    %546 = vmatmul.mubr.f32.gmra.mrb[0].mxu0 %v474
    %v547 = vpop.f32.mrb[0].mxu0
    %v548 = vadd.f32 %v467, %v547
    %v549 = vpop.f32.mrb[0].mxu0
    %550 = vdwg.mxu0
    %551 = vst.msk [vmem:[#allocation3] sm:$0xff] %vm460, %v543
    %552 = vst.msk [vmem:[#allocation3 + $0x8] sm:$0xff] %vm460, %v548
    %v553 = vld [vmem:[#allocation3] ss:$2 sm:$0xff]
    %s554 = scalar_lea.vmem [#allocation3], 1
    %v555 = vld [vmem:[%s554] ss:$2 sm:$0xff]
    %v556 = vmax.f32 %v553, %v555
    %v557 = vmax.f32 %v556, 0.0
    %v558 = vld [vmem:[%s7] sm:$0xff]
    %v559 = vld [vmem:[%s7 + $0x8] sm:$0xff]
    %v560 = vld [vmem:[%s7 + $0x10] sm:$0xff]
    %v561 = vld [vmem:[%s7 + $0x18] sm:$0xff]
    %v562 = vld [vmem:[%s7 + $0x20] sm:$0xff]
    %v563 = vld [vmem:[%s7 + $0x28] sm:$0xff]
    %v564 = vld [vmem:[%s7 + $0x30] sm:$0xff]
    %v565 = vld [vmem:[%s7 + $0x38] sm:$0xff]
    %v566 = vld [vmem:[%s7 + $0x40] sm:$0xff]
    %v567 = vld [vmem:[%s7 + $0x48] sm:$0xff]
    %v568 = vld [vmem:[%s7 + $0x50] sm:$0xff]
    %v569 = vld [vmem:[%s7 + $0x58] sm:$0xff]
    %v570 = vld [vmem:[%s8] sm:$0x1]
    %v572 = vrot.slane %v557, 7
    %v574 = vsel %vm167, 0.0, %v572
    %v575 = vsel %vm167, %v572, 0.0
    %v576 = vand.u32 %v183, 3
    %vm577 = vcmp.eq.s32.totalorder %v576, 0
    %v578 = vsel %vm577, 1, 0
    %vm579 = vcmp.eq.s32.totalorder %v578, 1
    %v580 = vsel %vm579, 0.0, %v574
    %vm581 = vcmp.eq.s32.totalorder %v576, 3
    %v582 = vsel %vm581, 1, 0
    %vm583 = vcmp.eq.s32.totalorder %v582, 1
    %v586 = vrot.slane %v574, 2
    %v587 = vrot.slane %v575, 2
    %v588 = vsel %vm221, %v586, %v587
    %v590 = vsel %vm583, 0.0, %v588
    %591 = vrot.lane.b32.xlu0 %v557, 32
    %v592 = vpop.permute.xlu0 %591
    %595 = vrot.lane.b32.xlu0 %v590, 64
    %v596 = vpop.permute.xlu0 %595
    %v598 = vsel %vm460, %v580, %v592
    %vm599 = vcmask 523264
    %v600 = vsel %vm599, %v598, %v596
    %v602 = vlaneseq
    %v603 = vshrl.u32 %v602, 7
    %v604 = vsub.s32 0, %v603
    %v605 = vrot.slane %v570, %v604
    %vm607 = vcmask 785408
    %v609 = vsel %vm607, %v600, 0
    %611 = vmatprep.subr.mxu0 0.0
    %612 = vmatpush1.msra.mxu0 %v558
    %613 = vmatprep.subr.mxu0 0.0
    %614 = vmatpush1.msra.mxu0 %v559
    %615 = vmatprep.subr.mxu0 0.0
    %616 = vmatpush1.msra.mxu0 %v560
    %617 = vmatprep.subr.mxu0 0.0
    %618 = vmatpush1.msra.mxu0 %v561
    %619 = vmatprep.subr.mxu0 0.0
    %620 = vmatpush1.msra.mxu0 %v562
    %621 = vmatprep.subr.mxu0 0.0
    %622 = vmatpush1.msra.mxu0 %v563
    %623 = vmatprep.subr.mxu0 0.0
    %624 = vmatpush1.msra.mxu0 %v564
    %625 = vmatprep.subr.mxu0 0.0
    %626 = vmatpush1.msra.mxu0 %v565
    %627 = vmatprep.subr.mxu0 0.0
    %628 = vmatpush1.msra.mxu0 %v566
    %629 = vmatprep.subr.mxu0 0.0
    %630 = vmatpush1.msra.mxu0 %v567
    %631 = vmatprep.subr.mxu0 0.0
    %632 = vmatpush1.msra.mxu0 %v568
    %633 = vmatprep.subr.mxu0 0.0
    %634 = vmatpush1.msra.mxu0 %v569
    %635 = vmatprep.subr.mxu0 0.0
    %636 = vmatpush1.msra.mxu0 0.0
    %637 = vmatprep.subr.mxu0 0.0
    %638 = vmatpush1.msra.mxu0 0.0
    %639 = vmatprep.subr.mxu0 0.0
    %640 = vmatpush1.msra.mxu0 0.0
    %641 = vmatprep.subr.mxu0 0.0
    %642 = vmatpush1.msra.mxu0 0.0
    %643 = vmatprep.subr.mxu0 0.0
    %644 = vmatpush1.msra.mxu0 0.0
    %645 = vmatprep.subr.mxu0 0.0
    %646 = vmatpush1.msra.mxu0 0.0
    %647 = vmatprep.subr.mxu0 0.0
    %648 = vmatpush1.msra.mxu0 0.0
    %649 = vmatprep.subr.mxu0 0.0
    %650 = vmatpush1.msra.mxu0 0.0
    %651 = vmatprep.subr.mxu0 0.0
    %652 = vmatpush1.msra.mxu0 0.0
    %653 = vmatprep.subr.mxu0 0.0
    %654 = vmatpush1.msra.mxu0 0.0
    %655 = vmatprep.subr.mxu0 0.0
    %656 = vmatpush1.msra.mxu0 0.0
    %657 = vmatprep.subr.mxu0 0.0
    %658 = vmatpush1.msra.mxu0 0.0
    %659 = vmatprep.subr.mxu0 0.0
    %660 = vmatpush1.msra.mxu0 0.0
    %661 = vmatprep.subr.mxu0 0.0
    %662 = vmatpush1.msra.mxu0 0.0
    %663 = vmatprep.subr.mxu0 0.0
    %664 = vmatpush1.msra.mxu0 0.0
    %665 = vmatprep.subr.mxu0 0.0
    %666 = vmatpush1.msra.mxu0 0.0
    %667 = vmatprep.subr.mxu0 0.0
    %668 = vmatpush1.msra.mxu0 0.0
    %669 = vmatprep.subr.mxu0 0.0
    %670 = vmatpush1.msra.mxu0 0.0
    %671 = vmatprep.subr.mxu0 0.0
    %672 = vmatpush1.msra.mxu0 0.0
    %673 = vmatprep.subr.mxu0 0.0
    %674 = vmatpush1.msra.mxu0 0.0
    %675 = vmatprep.mubr.f32.mxu0 0.0
    %676 = vmatmul.mubr.f32.gmra.mrb[0].mxu0 %v609
    %v677 = vpop.f32.mrb[0].mxu0
    %v678 = vadd.f32 %v605, %v677
    %v679 = vpop.f32.mrb[0].mxu0
    %680 = vdwg.mxu0
    %681 = vst.msk [vmem:[#allocation4] sm:$0xff] %vm460, %v678
    %v682 = vld [vmem:[#allocation4] ss:$2 sm:$0xf]
    %s683 = scalar_lea.vmem [#allocation4], 1
    %v684 = vld [vmem:[%s683] ss:$2 sm:$0xf]
    %v685 = vmax.f32 %v682, %v684
    %v686 = vmax.f32 %v685, 0.0
    %v687 = vld [vmem:[%s9] sm:$0xff]
    %v688 = vld [vmem:[%s9 + $0x8] sm:$0xff]
    %v689 = vld [vmem:[%s9 + $0x10] sm:$0xff]
    %v690 = vld [vmem:[%s9 + $0x18] sm:$0xff]
    %v691 = vld [vmem:[%s9 + $0x20] sm:$0xff]
    %v692 = vld [vmem:[%s9 + $0x28] sm:$0xff]
    %v693 = vld [vmem:[%s9 + $0x30] sm:$0xff]
    %v694 = vld [vmem:[%s9 + $0x38] sm:$0xff]
    %v695 = vld [vmem:[%s9 + $0x40] sm:$0xff]
    %v696 = vld [vmem:[%s9 + $0x48] sm:$0xff]
    %v697 = vld [vmem:[%s9 + $0x50] sm:$0xff]
    %v698 = vld [vmem:[%s9 + $0x58] sm:$0xff]
    %v699 = vld [vmem:[%s10] sm:$0x1]
    %v701 = vrot.slane %v686, 7
    %v703 = vsel %vm167, 0.0, %v701
    %vm704 = vcmask 1044480
    %v705 = vsel %vm704, %v703, 0.0
    %v706 = vand.u32 %v183, 1
    %vm707 = vcmp.eq.s32.totalorder %v706, 0
    %v708 = vsel %vm707, 1, 0
    %vm709 = vcmp.eq.s32.totalorder %v708, 1
    %v710 = vsel %vm709, 0.0, %v705
    %vm711 = vcmp.eq.s32.totalorder %v706, 1
    %v712 = vsel %vm711, 1, 0
    %vm713 = vcmp.eq.s32.totalorder %v712, 1
    %v715 = vrot.slane %v705, 2
    %v717 = vsel %vm713, 0.0, %v715
    %718 = vrot.lane.b32.xlu0 %v686, 32
    %v719 = vpop.permute.xlu0 %718
    %722 = vrot.lane.b32.xlu0 %v717, 64
    %v723 = vpop.permute.xlu0 %722
    %v725 = vsel %vm460, %v710, %v719
    %v726 = vsel %vm599, %v725, %v723
    %v728 = vlaneseq
    %v729 = vshrl.u32 %v728, 7
    %v730 = vsub.s32 0, %v729
    %v731 = vrot.slane %v699, %v730
    %v734 = vsel %vm607, %v726, 0
    %736 = vmatprep.subr.mxu0 0.0
    %737 = vmatpush1.msra.mxu0 %v687
    %738 = vmatprep.subr.mxu0 0.0
    %739 = vmatpush1.msra.mxu0 %v688
    %740 = vmatprep.subr.mxu0 0.0
    %741 = vmatpush1.msra.mxu0 %v689
    %742 = vmatprep.subr.mxu0 0.0
    %743 = vmatpush1.msra.mxu0 %v690
    %744 = vmatprep.subr.mxu0 0.0
    %745 = vmatpush1.msra.mxu0 %v691
    %746 = vmatprep.subr.mxu0 0.0
    %747 = vmatpush1.msra.mxu0 %v692
    %748 = vmatprep.subr.mxu0 0.0
    %749 = vmatpush1.msra.mxu0 %v693
    %750 = vmatprep.subr.mxu0 0.0
    %751 = vmatpush1.msra.mxu0 %v694
    %752 = vmatprep.subr.mxu0 0.0
    %753 = vmatpush1.msra.mxu0 %v695
    %754 = vmatprep.subr.mxu0 0.0
    %755 = vmatpush1.msra.mxu0 %v696
    %756 = vmatprep.subr.mxu0 0.0
    %757 = vmatpush1.msra.mxu0 %v697
    %758 = vmatprep.subr.mxu0 0.0
    %759 = vmatpush1.msra.mxu0 %v698
    %760 = vmatprep.subr.mxu0 0.0
    %761 = vmatpush1.msra.mxu0 0.0
    %762 = vmatprep.subr.mxu0 0.0
    %763 = vmatpush1.msra.mxu0 0.0
    %764 = vmatprep.subr.mxu0 0.0
    %765 = vmatpush1.msra.mxu0 0.0
    %766 = vmatprep.subr.mxu0 0.0
    %767 = vmatpush1.msra.mxu0 0.0
    %768 = vmatprep.subr.mxu0 0.0
    %769 = vmatpush1.msra.mxu0 0.0
    %770 = vmatprep.subr.mxu0 0.0
    %771 = vmatpush1.msra.mxu0 0.0
    %772 = vmatprep.subr.mxu0 0.0
    %773 = vmatpush1.msra.mxu0 0.0
    %774 = vmatprep.subr.mxu0 0.0
    %775 = vmatpush1.msra.mxu0 0.0
    %776 = vmatprep.subr.mxu0 0.0
    %777 = vmatpush1.msra.mxu0 0.0
    %778 = vmatprep.subr.mxu0 0.0
    %779 = vmatpush1.msra.mxu0 0.0
    %780 = vmatprep.subr.mxu0 0.0
    %781 = vmatpush1.msra.mxu0 0.0
    %782 = vmatprep.subr.mxu0 0.0
    %783 = vmatpush1.msra.mxu0 0.0
    %784 = vmatprep.subr.mxu0 0.0
    %785 = vmatpush1.msra.mxu0 0.0
    %786 = vmatprep.subr.mxu0 0.0
    %787 = vmatpush1.msra.mxu0 0.0
    %788 = vmatprep.subr.mxu0 0.0
    %789 = vmatpush1.msra.mxu0 0.0
    %790 = vmatprep.subr.mxu0 0.0
    %791 = vmatpush1.msra.mxu0 0.0
    %792 = vmatprep.subr.mxu0 0.0
    %793 = vmatpush1.msra.mxu0 0.0
    %794 = vmatprep.subr.mxu0 0.0
    %795 = vmatpush1.msra.mxu0 0.0
    %796 = vmatprep.subr.mxu0 0.0
    %797 = vmatpush1.msra.mxu0 0.0
    %798 = vmatprep.subr.mxu0 0.0
    %799 = vmatpush1.msra.mxu0 0.0
    %800 = vmatprep.mubr.f32.mxu0 0.0
    %801 = vmatmul.mubr.f32.gmra.mrb[0].mxu0 %v734
    %v802 = vpop.f32.mrb[0].mxu0
    %v803 = vadd.f32 %v731, %v802
    %v804 = vpop.f32.mrb[0].mxu0
    %805 = vdwg.mxu0
    %vm806 = vcmask 519168
    %807 = vst.msk [vmem:[#allocation5] sm:$0xf] %vm806, %v803
    %v808 = vld [vmem:[#allocation5] ss:$2 sm:$0x3]
    %s809 = scalar_lea.vmem [#allocation5], 1
    %v810 = vld [vmem:[%s809] ss:$2 sm:$0x3]
    %v811 = vmax.f32 %v808, %v810
    %v812 = vmax.f32 %v811, 0.0
    %v813 = vld [vmem:[%s11] sm:$0xff]
    %v814 = vld [vmem:[%s11 + $0x8] sm:$0xff]
    %v815 = vld [vmem:[%s11 + $0x10] sm:$0xff]
    %v816 = vld [vmem:[%s11 + $0x18] sm:$0xff]
    %v817 = vld [vmem:[%s11 + $0x20] sm:$0xff]
    %v818 = vld [vmem:[%s11 + $0x28] sm:$0xff]
    %v819 = vld [vmem:[%s11 + $0x30] sm:$0xff]
    %v820 = vld [vmem:[%s11 + $0x38] sm:$0xff]
    %v821 = vld [vmem:[%s11 + $0x40] sm:$0xff]
    %v822 = vld [vmem:[%s11 + $0x48] sm:$0xff]
    %v823 = vld [vmem:[%s11 + $0x50] sm:$0xff]
    %v824 = vld [vmem:[%s11 + $0x58] sm:$0xff]
    %v825 = vld [vmem:[%s11 + $0x60] sm:$0xff]
    %v826 = vld [vmem:[%s11 + $0x68] sm:$0xff]
    %v827 = vld [vmem:[%s11 + $0x70] sm:$0xff]
    %v828 = vld [vmem:[%s11 + $0x78] sm:$0xff]
    %v829 = vld [vmem:[%s12] sm:$0x3]
    %v831 = vlaneseq
    %v832 = vshrl.u32 %v831, 7
    %v833 = vsub.s32 0, %v832
    %v834 = vrot.slane %v829, %v833
    %v835 = vlaneseq
    %v836 = vshrl.u32 %v835, 7
    %v837 = vsub.s32 1, %v836
    %v838 = vrot.slane %v829, %v837
    %v842 = vsel %vm599, %v812, 0
    %844 = vmatprep.subr.mxu0 %v814
    %845 = vmatpush1.msra.mxu0 %v813
    %846 = vmatprep.subr.mxu0 %v816
    %847 = vmatpush1.msra.mxu0 %v815
    %848 = vmatprep.subr.mxu0 %v818
    %849 = vmatpush1.msra.mxu0 %v817
    %850 = vmatprep.subr.mxu0 %v820
    %851 = vmatpush1.msra.mxu0 %v819
    %852 = vmatprep.subr.mxu0 %v822
    %853 = vmatpush1.msra.mxu0 %v821
    %854 = vmatprep.subr.mxu0 %v824
    %855 = vmatpush1.msra.mxu0 %v823
    %856 = vmatprep.subr.mxu0 %v826
    %857 = vmatpush1.msra.mxu0 %v825
    %858 = vmatprep.subr.mxu0 %v828
    %859 = vmatpush1.msra.mxu0 %v827
    %860 = vmatprep.subr.mxu0 0.0
    %861 = vmatpush1.msra.mxu0 0.0
    %862 = vmatprep.subr.mxu0 0.0
    %863 = vmatpush1.msra.mxu0 0.0
    %864 = vmatprep.subr.mxu0 0.0
    %865 = vmatpush1.msra.mxu0 0.0
    %866 = vmatprep.subr.mxu0 0.0
    %867 = vmatpush1.msra.mxu0 0.0
    %868 = vmatprep.subr.mxu0 0.0
    %869 = vmatpush1.msra.mxu0 0.0
    %870 = vmatprep.subr.mxu0 0.0
    %871 = vmatpush1.msra.mxu0 0.0
    %872 = vmatprep.subr.mxu0 0.0
    %873 = vmatpush1.msra.mxu0 0.0
    %874 = vmatprep.subr.mxu0 0.0
    %875 = vmatpush1.msra.mxu0 0.0
    %876 = vmatprep.subr.mxu0 0.0
    %877 = vmatpush1.msra.mxu0 0.0
    %878 = vmatprep.subr.mxu0 0.0
    %879 = vmatpush1.msra.mxu0 0.0
    %880 = vmatprep.subr.mxu0 0.0
    %881 = vmatpush1.msra.mxu0 0.0
    %882 = vmatprep.subr.mxu0 0.0
    %883 = vmatpush1.msra.mxu0 0.0
    %884 = vmatprep.subr.mxu0 0.0
    %885 = vmatpush1.msra.mxu0 0.0
    %886 = vmatprep.subr.mxu0 0.0
    %887 = vmatpush1.msra.mxu0 0.0
    %888 = vmatprep.subr.mxu0 0.0
    %889 = vmatpush1.msra.mxu0 0.0
    %890 = vmatprep.subr.mxu0 0.0
    %891 = vmatpush1.msra.mxu0 0.0
    %892 = vmatprep.subr.mxu0 0.0
    %893 = vmatpush1.msra.mxu0 0.0
    %894 = vmatprep.subr.mxu0 0.0
    %895 = vmatpush1.msra.mxu0 0.0
    %896 = vmatprep.subr.mxu0 0.0
    %897 = vmatpush1.msra.mxu0 0.0
    %898 = vmatprep.subr.mxu0 0.0
    %899 = vmatpush1.msra.mxu0 0.0
    %900 = vmatprep.subr.mxu0 0.0
    %901 = vmatpush1.msra.mxu0 0.0
    %902 = vmatprep.subr.mxu0 0.0
    %903 = vmatpush1.msra.mxu0 0.0
    %904 = vmatprep.subr.mxu0 0.0
    %905 = vmatpush1.msra.mxu0 0.0
    %906 = vmatprep.subr.mxu0 0.0
    %907 = vmatpush1.msra.mxu0 0.0
    %908 = vmatprep.mubr.f32.mxu0 0.0
    %909 = vmatmul.mubr.f32.gmra.mrb[0].mxu0 %v842
    %v910 = vpop.f32.mrb[0].mxu0
    %v911 = vadd.f32 %v834, %v910
    %v912 = vpop.f32.mrb[0].mxu0
    %v913 = vadd.f32 %v838, %v912
    %914 = vdwg.mxu0
    %v917 = vcombine.low %v911, %v913
    %v919 = vunpack.c.l.s4 1983009808
    %v920 = vunpack.c.0.s8 %v919
    %v921 = vlaneseq
    %v922 = vshrl.u32 %v921, 7
    %v923 = vsub.s32 %v920, %v922
    %v924 = vrot.slane %v917, %v923
    %vm926 = vcmask 125954
    %vm927 = vmor %vm926, %vm71
    %928 = vst.msk [vmem:[#allocation6] sm:$0xf] %vm927, %v924
    // Predicated region
    $region54: #{cnn_forward.1} parent=1 // pred_check
      _
    $region55: #{cnn_forward.1} parent=1 // pred_check_branch
      %930 = sbr.rel (0) target = $region57
    $region56: #{cnn_forward.1} parent=1 // pred_region
      %s932 = ssub.s32 64, 64
      %933 = vsyncadd [#allocation7], %s932
      %s935 = sshll.u32 [#allocation6], 4
      %s936 = int_to_ptr.vmem [resolvable:$true] %s935
      %938 = dma.vmem_to_hbm [thread:$0]  %s936, 64, %s13, [#allocation7]
    $region57: #{cnn_forward.1} parent=1 // pred_fallthru
      _
    // Predicated region
    $region58: #{cnn_forward.1} parent=1 // pred_check
      _
    $region59: #{cnn_forward.1} parent=1 // pred_check_branch
      %940 = sbr.rel (0) target = $region61
    $region60: #{cnn_forward.1} parent=1 // pred_region
      %941 = dma.done [#allocation7], 64
    $region61: #{cnn_forward.1} parent=1 // pred_fallthru
      _
    %942 = vsyncpa [#allocation7], 1

</llo_original>
